<compile_context>
chip_gen: v5e
topology: v5e:2x2
jax: 0.10.0
libtpu: 0.0.40
codegen_flags: <defaults>
</compile_context>

<pallas_src>
import jax
import jax.numpy as jnp
from jax.experimental import pallas as pl
from jax.experimental.pallas import tpu as pltpu


def build_pe_table(d_model: int, max_len: int = 5000,
                   dtype=jnp.float32) -> jnp.ndarray:
    """Deterministic sinusoidal PE table, identical to the PyTorch __init__.

    Built in f32 for accuracy, then stored in the compute dtype so the forward
    pass never needs an extra astype / HBM round-trip.
    """
    position = jnp.arange(0, max_len, dtype=jnp.float32)[:, None]            # (max_len, 1)
    div_term = jnp.exp(jnp.arange(0, d_model, 2, dtype=jnp.float32)
                       * (-jnp.log(10000.0) / d_model))                      # (d_model/2,)
    pe = jnp.zeros((max_len, d_model), dtype=jnp.float32)
    pe = pe.at[:, 0::2].set(jnp.sin(position * div_term))
    pe = pe.at[:, 1::2].set(jnp.cos(position * div_term))
    return pe.astype(dtype)                                                  # (max_len, d_model)


def _pe_add_kernel(x_ref, pe_ref, o_ref):
    # x block (tb, rows, C), pe block (rows, C): pe broadcasts over the leading
    # batch dim.  Result written straight to the output ref (no scratch hop).
    # TODO(synk): optional further win for tiny batch: compute pe in-kernel
    # (iota rows + per-lane freq vector, sin/cos on EUP) and drop the pe input
    # entirely (~1/(2B+1) of HBM traffic); needs v5e bundle validation first.
    o_ref[...] = x_ref[...] + pe_ref[...]


# Byte-targeted tile sizing: ~4 MiB per x tile (measured f32-add HBM efficiency
# is ~85-86% of roofline at >=1-4 MiB tiles).  Working set = 6 tiles (x/out/pe,
# each double-buffered) ~= 24 MiB; scoped VMEM raised to 40 MiB to cover it on
# v5e (16 MiB default) while staying well under v7x's 64 MiB physical VMEM.
_TARGET_TILE_BYTES = 4 * 1024 * 1024
_VMEM_LIMIT_BYTES = 40 * 1024 * 1024


def _sublane_multiple(itemsize: int) -> int:
    # f32 -> 8, bf16/f16 -> 16, int8/fp8 -> 32 (sub-32-bit packs along sublanes).
    return max(8, 32 // max(1, itemsize))


def _pick_rows(R: int, C: int, itemsize: int) -> int:
    """Rows per tile: byte-targeted, sublane-aligned, never exceeding R."""
    per_row_bytes = C * itemsize
    rows = _TARGET_TILE_BYTES // max(1, per_row_bytes)
    if rows >= R:
        return R                                   # one tile covers the whole axis
    sub = _sublane_multiple(itemsize)
    rows = max(sub, (rows // sub) * sub)           # dtype-aware sublane alignment
    return R if rows >= R else rows


def positional_encoding_forward(x: jnp.ndarray, pe_table: jnp.ndarray,
                                *, donate_x: bool = False) -> jnp.ndarray:
    """x: (B, S, D); returns x + pe[:S], exactly like the PyTorch forward."""
    B, S, D = x.shape
    if pe_table.dtype != x.dtype:
        # Slice BEFORE casting so only the S rows actually consumed pay the pass.
        # TODO(synk): PyTorch adds the f32 buffer (f32 accumulate for bf16 x);
        # adding in x.dtype trades a little precision for halved pe HBM traffic.
        pe_table = pe_table[:S].astype(x.dtype)
    itemsize = jnp.dtype(x.dtype).itemsize
    io_alias = {0: 0} if donate_x else {}

    # Choose a lane-dense 3-D view (B, R, C) of the problem.
    if D % 128 == 0:
        # Main path: keep D on the lane axis; pe sliced purely via index_map.
        x3, R, C = x, S, D
        pe3 = pe_table
    elif (S * D) % 128 == 0:
        # Densify small D (e.g. 32): fuse (S, D) into rows of 128 lanes so every
        # tile is fully (8,128)-dense and stores are unmasked full-width vst.
        C = 128
        R = (S * D) // 128
        x3 = x.reshape(B, R, C)
        pe3 = pe_table[:S].reshape(R, C)
    else:
        # Last resort: masked partial stores on the lane axis, but still tiled
        # along seq so large arrays never exceed scoped VMEM.
        x3, R, C = x, S, D
        pe3 = pe_table

    rows = _pick_rows(R, C, itemsize)

    if rows >= R and B > 1:
        # One tile already covers all rows: fold batch rows into the block so we
        # don't pay ~0.35 us of grid-step overhead per tiny (1, R, C) DMA.
        pe3 = pe3[:R]                               # block == full pe dims → legal
        tile_bytes = max(1, R * C * itemsize)
        tb = max(1, min(B, _TARGET_TILE_BYTES // tile_bytes))
        grid = (pl.cdiv(B, tb),)
        out3 = pl.pallas_call(
            _pe_add_kernel,
            out_shape=jax.ShapeDtypeStruct((B, R, C), x.dtype),
            grid_spec=pltpu.PrefetchScalarGridSpec(
                num_scalar_prefetch=0,
                grid=grid,
                in_specs=[
                    pl.BlockSpec((tb, R, C), lambda b: (b, 0, 0)),
                    pl.BlockSpec((R, C), lambda b: (0, 0)),
                ],
                out_specs=pl.BlockSpec((tb, R, C), lambda b: (b, 0, 0)),
            ),
            compiler_params=pltpu.CompilerParams(
                dimension_semantics=("parallel",),
                vmem_limit_bytes=_VMEM_LIMIT_BYTES,
            ),
            input_output_aliases=io_alias,
        )(x3, pe3)
    else:
        if rows >= R:
            # B == 1: split the seq axis into >=2 blocks when possible so a v7x
            # second TensorCore isn't idle on a degenerate (1, 1) grid.
            sub = _sublane_multiple(itemsize)
            if R >= 2 * sub:
                half = (R + 1) // 2
                rows = min(R, ((half + sub - 1) // sub) * sub)
        # Row-tiled path: batch innermost and 'arbitrary' so each core iterates b
        # consecutively and the constant pe block index elides its re-DMA; the
        # seq-tile axis stays 'parallel' for megacore sharding.
        grid = (pl.cdiv(R, rows), B)
        out3 = pl.pallas_call(
            _pe_add_kernel,
            out_shape=jax.ShapeDtypeStruct((B, R, C), x.dtype),
            grid_spec=pltpu.PrefetchScalarGridSpec(
                num_scalar_prefetch=0,
                grid=grid,
                in_specs=[
                    pl.BlockSpec((1, rows, C), lambda s, b: (b, s, 0)),
                    pl.BlockSpec((rows, C), lambda s, b: (s, 0)),
                ],
                out_specs=pl.BlockSpec((1, rows, C), lambda s, b: (b, s, 0)),
            ),
            compiler_params=pltpu.CompilerParams(
                dimension_semantics=("parallel", "arbitrary"),
                vmem_limit_bytes=_VMEM_LIMIT_BYTES,
            ),
            input_output_aliases=io_alias,
        )(x3, pe3)

    return out3 if out3.shape == (B, S, D) else out3.reshape(B, S, D)


if __name__ == "__main__":
    # Small shapes consistent with the module's forward: (batch, seq, d_model)
    batch, seq, d_model = 2, 8, 32
    max_len = 64

    key = jax.random.PRNGKey(0)
    x = jax.random.normal(key, (batch, seq, d_model), dtype=jnp.float32)

    pe_table = build_pe_table(d_model, max_len, dtype=x.dtype)

    out = positional_encoding_forward(x, pe_table)
    out = jax.block_until_ready(out)

    # Sanity check against a pure-JAX reference of the PyTorch forward.
    ref = x + pe_table[None, :seq, :]
    assert out.shape == (batch, seq, d_model)
    assert jnp.allclose(out, ref, atol=1e-6, rtol=1e-6)

    # Lane-dense main path (d_model multiple of 128), batch-folded branch.
    x_big = jax.random.normal(jax.random.PRNGKey(1), (2, 64, 128), dtype=jnp.float32)
    pe_big = build_pe_table(128, 128, dtype=x_big.dtype)
    out_big = jax.block_until_ready(positional_encoding_forward(x_big, pe_big))
    ref_big = x_big + pe_big[None, :64, :]
    assert jnp.allclose(out_big, ref_big, atol=1e-6, rtol=1e-6)

    # Row-tiled branch (B == 1, seq split across >=2 tiles) to exercise the grid.
    x_b1 = jax.random.normal(jax.random.PRNGKey(2), (1, 256, 128), dtype=jnp.float32)
    pe_b1 = build_pe_table(128, 512, dtype=x_b1.dtype)
    out_b1 = jax.block_until_ready(positional_encoding_forward(x_b1, pe_b1))
    ref_b1 = x_b1 + pe_b1[None, :256, :]
    assert jnp.allclose(out_b1, ref_b1, atol=1e-6, rtol=1e-6)

    print("KERNEL_OK")
</pallas_src>

<mosaic_0001>
module attributes {stable_mosaic.version = 11 : i64} {
  func.func @_pe_add_kernel(%arg0: i32, %arg1: memref<2x2x128xf32, #tpu.memory_space<vmem>>, %arg2: memref<2x128xf32, #tpu.memory_space<vmem>>, %arg3: memref<2x2x128xf32, #tpu.memory_space<vmem>>) attributes {dimension_semantics = [#tpu.dimension_semantics<parallel>], iteration_bounds = array<i64: 1>, scalar_prefetch = 0 : i64, scratch_operands = 0 : i64, tpu.core_type = #tpu.core_type<tc>, window_params = [{transform_indices = @transform_0, window_bounds = array<i64: 2, 2, 128>}, {pipeline_mode = #tpu.pipeline_mode<synchronous>, transform_indices = @transform_1, window_bounds = array<i64: 2, 128>}, {transform_indices = @transform_2, window_bounds = array<i64: 2, 2, 128>}]} {
    %c0 = arith.constant 0 : index
    %c0_0 = arith.constant 0 : index
    %c0_1 = arith.constant 0 : index
    %0 = vector.load %arg1[%c0, %c0_0, %c0_1] : memref<2x2x128xf32, #tpu.memory_space<vmem>>, vector<2x2x128xf32>
    %c0_2 = arith.constant 0 : index
    %c0_3 = arith.constant 0 : index
    %1 = vector.load %arg2[%c0_2, %c0_3] : memref<2x128xf32, #tpu.memory_space<vmem>>, vector<2x128xf32>
    %2 = vector.shape_cast %1 : vector<2x128xf32> to vector<1x2x128xf32>
    %3 = vector.broadcast %2 : vector<1x2x128xf32> to vector<2x2x128xf32>
    %4 = arith.addf %0, %3 : vector<2x2x128xf32>
    %c0_4 = arith.constant 0 : index
    %c0_5 = arith.constant 0 : index
    %c0_6 = arith.constant 0 : index
    %5 = vector.load %arg3[%c0_4, %c0_5, %c0_6] : memref<2x2x128xf32, #tpu.memory_space<vmem>>, vector<2x2x128xf32>
    tpu.vector_store %arg3[%c0_4, %c0_5, %c0_6], %4 {strides = array<i32>} : memref<2x2x128xf32, #tpu.memory_space<vmem>>, vector<2x2x128xf32>,
    return
  }
  func.func @transform_0(%arg0: i32) -> (i32, i32, i32) {
    %c0_i32 = arith.constant 0 : i32
    %c0_i32_0 = arith.constant 0 : i32
    %c0_i32_1 = arith.constant 0 : i32
    return %arg0, %c0_i32, %c0_i32_0 : i32, i32, i32
  }
  func.func @transform_1(%arg0: i32) -> (i32, i32) {
    %c0_i32 = arith.constant 0 : i32
    %c0_i32_0 = arith.constant 0 : i32
    %c0_i32_1 = arith.constant 0 : i32
    return %c0_i32, %c0_i32_0 : i32, i32
  }
  func.func @transform_2(%arg0: i32) -> (i32, i32, i32) {
    %c0_i32 = arith.constant 0 : i32
    %c0_i32_0 = arith.constant 0 : i32
    %c0_i32_1 = arith.constant 0 : i32
    return %arg0, %c0_i32, %c0_i32_0 : i32, i32, i32
  }
}

</mosaic_0001>

<llo_original>
// kernel: tpu_custom_call.1
$region0: #{tpu_custom_call.1}
  #allocation0 [shape = 'u32[]', space=smem, size = 0x4, offset = 0x4, fixed_abs, tag = 'smem constant byte address 0x4 - core index']
  #allocation1 [shape = 'u32[72,128]{1,0:T(1,128)}', space=vmem, size = 0x9000, scoped, tag = 'internal scratch']
  %s0 = inlined_call_operand.hbm [shape: f32[2,2,128], index: 0, kind: input, shape index: {}]
  %s1 = inlined_call_operand.hbm [shape: f32[2,128], index: 1, kind: input, shape index: {}]
  %s2 = inlined_call_operand.hbm [shape: f32[2,2,128], index: 2, kind: output, shape index: {}]
  %s3 = sld [smem:[#allocation0]]
  $region26: #{tpu_custom_call.1} parent=0
    _
  %s5 = ssub.s32 1, %s3
  %s6 = scalar_select 0, %s5, %s3
  $region1: #{tpu_custom_call.1} parent=0
    #allocation2 [shape = 'u8[2048]{0}', space=vmem, size = 0x800, scoped, tag = 'input window, operand 0, single buffered']
    #allocation3 [shape = 's32[1]{0}', space=sflag, size = 0x4, scoped, tag = 'scoped memory for tpu_custom_call.1']
    #allocation4 [shape = 's32[1]{0}', space=sflag, size = 0x4, scoped, tag = 'scoped memory for tpu_custom_call.1']
    #allocation5 [shape = 'u8[1024]{0}', space=vmem, size = 0x400, scoped, tag = 'input window, operand 1, single buffered']
    #allocation6 [shape = 's32[1]{0}', space=sflag, size = 0x4, scoped, tag = 'scoped memory for tpu_custom_call.1']
    #allocation7 [shape = 'u8[2048]{0}', space=vmem, size = 0x800, scoped, tag = 'output window, operand 0, single buffered']
    %7 = vsyncpa [#allocation3], 0
    %8 = vsyncpa [#allocation6], 0
    %9 = vsyncpa [#allocation4], 0
    // Predicated region
    $region2: #{tpu_custom_call.1} parent=1 // pred_check
      _
    $region3: #{tpu_custom_call.1} parent=1 // pred_check_branch
      %11 = sbr.rel (0) target = $region5
    $region4: #{tpu_custom_call.1} parent=1 // pred_region
      %13 = vsyncadd [#allocation3], 0
      %s14 = sshll.u32 %s0, 4
      %s15 = int_to_ptr.hbm [resolvable:$true] %s14
      %s16 = sshll.u32 [#allocation2], 4
      %s17 = int_to_ptr.vmem [resolvable:$true] %s16
      %22 = dma.hbm_to_vmem [thread:$0]  %s15, 64, %s17, [#allocation3], 32, 32, 2
    $region5: #{tpu_custom_call.1} parent=1 // pred_fallthru
      _
    // Predicated region
    $region6: #{tpu_custom_call.1} parent=1 // pred_check
      _
    $region7: #{tpu_custom_call.1} parent=1 // pred_check_branch
      %24 = sbr.rel (0) target = $region9
    $region8: #{tpu_custom_call.1} parent=1 // pred_region
      %26 = vsyncadd [#allocation6], 0
      %s28 = sshll.u32 %s1, 4
      %s29 = int_to_ptr.hbm [resolvable:$true] %s28
      %s30 = sshll.u32 [#allocation5], 4
      %s31 = int_to_ptr.vmem [resolvable:$true] %s30
      %33 = dma.hbm_to_vmem [thread:$0]  %s29, 32, %s31, [#allocation6]
    $region9: #{tpu_custom_call.1} parent=1 // pred_fallthru
      _
    // Predicated region
    $region10: #{tpu_custom_call.1} parent=1 // pred_check
      _
    $region11: #{tpu_custom_call.1} parent=1 // pred_check_branch
      %35 = sbr.rel (0) target = $region13
    $region12: #{tpu_custom_call.1} parent=1 // pred_region
      %37 = dma.done [#allocation3], 64
    $region13: #{tpu_custom_call.1} parent=1 // pred_fallthru
      _
    // Predicated region
    $region14: #{tpu_custom_call.1} parent=1 // pred_check
      _
    $region15: #{tpu_custom_call.1} parent=1 // pred_check_branch
      %39 = sbr.rel (0) target = $region17
    $region16: #{tpu_custom_call.1} parent=1 // pred_region
      %41 = dma.done [#allocation6], 32
    $region17: #{tpu_custom_call.1} parent=1 // pred_fallthru
      _
    %v42 = vld [vmem:[#allocation2] sm:$0x3]
    %v43 = vld [vmem:[#allocation2 + $0x2] sm:$0x3]
    %v44 = vld [vmem:[#allocation5] sm:$0x3]
    %v45 = vadd.f32 %v42, %v44
    %v46 = vadd.f32 %v43, %v44
    %47 = vst [vmem:[#allocation7] sm:$0x3] %v45
    %48 = vst [vmem:[#allocation7 + $0x2] sm:$0x3] %v46
    // Predicated region
    $region18: #{tpu_custom_call.1} parent=1 // pred_check
      _
    $region19: #{tpu_custom_call.1} parent=1 // pred_check_branch
      %50 = sbr.rel (0) target = $region21
    $region20: #{tpu_custom_call.1} parent=1 // pred_region
      %52 = vsyncadd [#allocation4], 0
      %s53 = sshll.u32 [#allocation7], 4
      %s54 = int_to_ptr.vmem [resolvable:$true] %s53
      %s55 = sshll.u32 %s2, 4
      %s56 = int_to_ptr.hbm [resolvable:$true] %s55
      %61 = dma.vmem_to_hbm [thread:$0]  %s54, 64, %s56, [#allocation4], 32, 32, 2
    $region21: #{tpu_custom_call.1} parent=1 // pred_fallthru
      _
    // Predicated region
    $region22: #{tpu_custom_call.1} parent=1 // pred_check
      _
    $region23: #{tpu_custom_call.1} parent=1 // pred_check_branch
      %63 = sbr.rel (0) target = $region25
    $region24: #{tpu_custom_call.1} parent=1 // pred_region
      %65 = dma.done [#allocation4], 64
    $region25: #{tpu_custom_call.1} parent=1 // pred_fallthru
      _
    %66 = vsyncpa [#allocation3], 1
    %67 = vsyncpa [#allocation6], 1
    %68 = vsyncpa [#allocation4], 1

</llo_original>
